<compile_context>
chip_gen: v7x
topology: tpu7x:2x2x1
jax: 0.10.0
libtpu: 0.0.40
codegen_flags: <defaults>
</compile_context>

<pallas_src>
import functools

import jax
import jax.numpy as jnp
import numpy as np
from jax import lax
from jax.experimental import pallas as pl
from jax.experimental.pallas import tpu as pltpu


def conv_block_kernel(x_ref, w1_ref, w2_ref, shifts_ref, masks_ref,
                      out_ref, act_ref, *, H, W, B, cp_in, cp_out):
    # x_ref      : (B, Cin, H*W)       lane-dense input images (NCHW flattened)
    # w1_ref     : (Cout, 9*cp_in)     im2col conv1 weights (BN scale folded in)
    # w2_ref     : (Cout, 9*cp_out)    im2col conv2 weights (BN scale folded in)
    # shifts_ref : (Cout, 2)           [shift1 | shift2] (BN shift + conv bias)
    # masks_ref  : (9, B*H*W)          per-tap 0/1 boundary masks
    # out_ref    : (B, Cout, H*W)      lane-dense output
    # act_ref    : (Cout, B*H*W) f32   VMEM-resident post-ReLU activation
    HW = H * W
    BHW = B * HW
    cdt = x_ref.dtype

    # Per-tap lane rotation:  tap[(kh,kw)][p] = x[p + (kh-1)*W + (kw-1)], i.e.
    # a rotate toward higher lanes by -( (kh-1)*W + (kw-1) ); wrapped lanes are
    # zeroed by the masks.  (pltpu.roll could replace this to move the work to
    # the XLU slot; the explicit slice+concat form below has identical results.)
    rolls = [-((kh - 1) * W + (kw - 1)) for kh in range(3) for kw in range(3)]

    def lane_roll(v, s):
        i = (-s) % BHW
        if i == 0:
            return v
        return jnp.concatenate([v[:, i:], v[:, :i]], axis=1)

    def im2col(base):
        # base: (cp, B*HW) channel-padded slab -> in-register (9*cp, B*HW) patch.
        taps = []
        for t, s in enumerate(rolls):
            v = lane_roll(base, s)
            if t != 4:                      # centre tap needs no boundary mask
                v = v * masks_ref[pl.ds(t, 1), :]
            taps.append(v)
        return jnp.concatenate(taps, axis=0)

    def pad_channels(v, cp):
        c = v.shape[0]
        if cp == c:
            return v
        return jnp.concatenate([v, jnp.zeros((cp - c, BHW), v.dtype)], axis=0)

    # Assemble the (cp_in, B*HW) input slab: lane-concat the B images, then one
    # sublane zero-pad of the channel axis (weights carry matching zero cols).
    imgs = [x_ref[b] for b in range(B)]                       # each (Cin, HW)
    base1 = imgs[0] if B == 1 else jnp.concatenate(imgs, axis=1)
    base1 = pad_channels(base1, cp_in)

    sh = shifts_ref[...]                                      # (Cout, 2) f32
    shift1 = sh[:, 0:1]
    shift2 = sh[:, 1:2]

    # conv1 -> BN (scale folded into w1, bias folded into shift1) -> ReLU.
    x1 = jnp.dot(w1_ref[...], im2col(base1),
                 preferred_element_type=jnp.float32) + shift1  # (Cout, BHW) f32
    a = jnp.maximum(x1, 0.0)
    act_ref[...] = a          # keep the activation VMEM-resident for the residual

    # conv2 -> BN.
    base2 = pad_channels(a.astype(cdt), cp_out)
    x2 = jnp.dot(w2_ref[...], im2col(base2),
                 preferred_element_type=jnp.float32) + shift2  # (Cout, BHW) f32

    # Residual (post-ReLU x_1, because nn.ReLU(inplace=True) aliases it) + ReLU;
    # per-image lane-dense stores.
    out = jnp.maximum(act_ref[...] + x2, 0.0).astype(out_ref.dtype)
    for b in range(B):
        out_ref[b] = out[:, b * HW:(b + 1) * HW]


def _round_up(x, m):
    return (x + m - 1) // m * m


def _pick_batch_block(n, hw):
    # Batch as many images per grid step as possible (fewer, fatter steps) while
    # keeping B*HW lanes modest so the in-register patch stays in vregs.
    cap = max(1, 1024 // max(hw, 1))
    b = min(n, cap)
    while b > 1 and n % b:
        b -= 1
    return max(b, 1)


def inconv_forward(x_nchw, params, *, compute_dtype=jnp.float32,
                   out_dtype=jnp.float32):
    """x_nchw: (N, Cin, H, W) -> (N, Cout, H, W).

    compute_dtype: matmul-operand dtype (accumulation is always f32).  Use
      jnp.bfloat16 on v6e/v7x at production sizes; keep f32 on v5e.
    out_dtype: dtype of the kernel's output store (bf16 halves the dominant
      write stream when downstream tolerates it).
    """
    N, Cin, H, W = x_nchw.shape
    Cout = params["w1"].shape[0]
    HW = H * W
    assert H >= 2 and W >= 2, "1-pixel-wide images are an untested edge case"

    cdt = jnp.dtype(compute_dtype)
    sub = 32 // cdt.itemsize                  # sublane multiple: 8 f32 / 16 bf16
    cp_in = _round_up(Cin, sub)
    cp_out = _round_up(Cout, sub)

    B = _pick_batch_block(N, HW)
    steps = N // B
    BHW = B * HW

    # Fold BatchNorm (eval mode) into the weights/shifts:
    #   BN(conv(x) + b) = (scale*W) (*) x + (shift + b*scale)
    # TODO(synk): training-mode BN (batch statistics) and Dropout2d with p>0 are
    # not implemented; eval-mode semantics with dropout=0 are used.
    eps = 1e-5
    scale = params["gamma"] / jnp.sqrt(params["rvar"] + eps)             # (Cout,)
    shift = params["beta"] - params["rmean"] * scale
    shifts = jnp.stack([shift + params["b1"] * scale,
                        shift + params["b2"] * scale], axis=1).astype(jnp.float32)

    def im2col_weights(w, cin, cp):
        # (Cout, cin, 3, 3) -> (Cout, 9*cp); column (kh*3+kw)*cp + ci, channel
        # axis zero-padded to the sublane multiple cp.
        co = w.shape[0]
        wm = jnp.transpose(w, (0, 2, 3, 1)).reshape(co, 9, cin)
        if cp > cin:
            wm = jnp.pad(wm, ((0, 0), (0, 0), (0, cp - cin)))
        return wm.reshape(co, 9 * cp)

    w1m = (scale[:, None] * im2col_weights(params["w1"], Cin, cp_in)).astype(cdt)
    w2m = (scale[:, None] * im2col_weights(params["w2"], Cout, cp_out)).astype(cdt)

    # Per-tap 0/1 boundary masks over the flat pixel axis, tiled across the B
    # images sharing the lane axis (also kills roll wrap-around lanes).
    rows = np.arange(HW, dtype=np.int64) // W
    cols = np.arange(HW, dtype=np.int64) % W
    m = np.ones((9, HW), np.float32)
    for kh in range(3):
        for kw in range(3):
            keep = np.ones(HW, bool)
            if kh == 0:
                keep &= rows != 0
            if kh == 2:
                keep &= rows != H - 1
            if kw == 0:
                keep &= cols != 0
            if kw == 2:
                keep &= cols != W - 1
            m[kh * 3 + kw] = keep
    masks = jnp.asarray(np.tile(m, (1, B)), dtype=cdt)                   # (9, BHW)

    # NCHW -> (N, C, H*W) is a free reshape (no transpose, no extra HBM pass).
    x_flat = x_nchw.reshape(N, Cin, HW).astype(cdt)

    kernel = functools.partial(conv_block_kernel, H=H, W=W, B=B,
                               cp_in=cp_in, cp_out=cp_out)

    flops = 2 * N * HW * 9 * (Cout * Cin + Cout * Cout)
    bytes_accessed = (N * Cin * HW * cdt.itemsize
                      + N * Cout * HW * jnp.dtype(out_dtype).itemsize
                      + (w1m.size + w2m.size) * cdt.itemsize
                      + shifts.size * 4 + masks.size * cdt.itemsize)

    # TODO(synk): for production U-Net sizes add a row-tile grid axis with a
    # 1-row halo and kh-grouped (K=3*C) accumulation so blocks fit v7x's 64 MiB
    # VMEM / both TCs (raise vmem_limit_bytes on v6e for >=512-wide tiles);
    # whole-image blocks are fine at this test size.
    out_flat = pl.pallas_call(
        kernel,
        out_shape=jax.ShapeDtypeStruct((N, Cout, HW), out_dtype),
        grid_spec=pltpu.PrefetchScalarGridSpec(
            num_scalar_prefetch=0,
            grid=(steps,),
            in_specs=[
                pl.BlockSpec((B, Cin, HW), lambda g: (g, 0, 0)),
                pl.BlockSpec((Cout, 9 * cp_in), lambda g: (0, 0)),
                pl.BlockSpec((Cout, 9 * cp_out), lambda g: (0, 0)),
                pl.BlockSpec((Cout, 2), lambda g: (0, 0)),
                pl.BlockSpec((9, BHW), lambda g: (0, 0)),
            ],
            out_specs=pl.BlockSpec((B, Cout, HW), lambda g: (g, 0, 0)),
            scratch_shapes=[pltpu.VMEM((Cout, BHW), jnp.float32)],
        ),
        compiler_params=pltpu.CompilerParams(
            dimension_semantics=("parallel",)),
        cost_estimate=pl.CostEstimate(flops=flops, transcendentals=0,
                                      bytes_accessed=bytes_accessed),
    )(x_flat, w1m, w2m, shifts, masks)

    return out_flat.reshape(N, Cout, H, W)


def init_params(key, in_ch, out_ch):
    """Deterministic synthetic parameters (PyTorch layouts: OIHW weights)."""
    ks = jax.random.split(key, 8)
    w1 = 0.1 * jax.random.normal(ks[0], (out_ch, in_ch, 3, 3), jnp.float32)
    b1 = 0.1 * jax.random.normal(ks[1], (out_ch,), jnp.float32)
    w2 = 0.1 * jax.random.normal(ks[2], (out_ch, out_ch, 3, 3), jnp.float32)
    b2 = 0.1 * jax.random.normal(ks[3], (out_ch,), jnp.float32)
    gamma = 1.0 + 0.1 * jax.random.normal(ks[4], (out_ch,), jnp.float32)
    beta = 0.1 * jax.random.normal(ks[5], (out_ch,), jnp.float32)
    rmean = 0.1 * jax.random.normal(ks[6], (out_ch,), jnp.float32)
    rvar = jax.random.uniform(ks[7], (out_ch,), jnp.float32, 0.5, 1.5)
    return dict(w1=w1, b1=b1, w2=w2, b2=b2, gamma=gamma, beta=beta,
                rmean=rmean, rvar=rvar)


def inconv_reference(x_nchw, p):
    """Pure-JAX NCHW reference with the exact PyTorch forward semantics
    (eval-mode BN, dropout=0, nn.ReLU(inplace=True) aliasing x_1)."""
    dn = ("NCHW", "OIHW", "NCHW")
    eps = 1e-5
    scale = (p["gamma"] / jnp.sqrt(p["rvar"] + eps)).reshape(1, -1, 1, 1)
    shift = p["beta"].reshape(1, -1, 1, 1) - p["rmean"].reshape(1, -1, 1, 1) * scale
    y1 = lax.conv_general_dilated(x_nchw, p["w1"], (1, 1), "SAME",
                                  dimension_numbers=dn)
    x1 = (y1 + p["b1"].reshape(1, -1, 1, 1)) * scale + shift
    a = jnp.maximum(x1, 0.0)          # inplace ReLU overwrites x_1 in PyTorch
    y2 = lax.conv_general_dilated(a, p["w2"], (1, 1), "SAME",
                                  dimension_numbers=dn)
    x2 = (y2 + p["b2"].reshape(1, -1, 1, 1)) * scale + shift
    return jnp.maximum(a + x2, 0.0)


if __name__ == "__main__":
    key = jax.random.PRNGKey(0)
    k_x, k_p = jax.random.split(key)

    N, Cin, Cout, H, W = 2, 4, 8, 16, 16   # dropout = 0.0 -> Dropout2d is a no-op
    x = jax.random.normal(k_x, (N, Cin, H, W), jnp.float32)
    params = init_params(k_p, Cin, Cout)

    out = jax.block_until_ready(inconv_forward(x, params))
    ref = jax.block_until_ready(inconv_reference(x, params))

    assert out.shape == (N, Cout, H, W)
    if not jnp.allclose(out, ref, atol=1e-3, rtol=1e-3):
        raise AssertionError("Pallas kernel mismatch vs JAX reference")

    print("KERNEL_OK")
</pallas_src>

<mosaic_0001>
module attributes {stable_mosaic.version = 11 : i64} {
  func.func @conv_block_kernel(%arg0: i32, %arg1: memref<2x4x256xf32, #tpu.memory_space<vmem>>, %arg2: memref<8x72xf32, #tpu.memory_space<vmem>>, %arg3: memref<8x72xf32, #tpu.memory_space<vmem>>, %arg4: memref<8x2xf32, #tpu.memory_space<vmem>>, %arg5: memref<9x512xf32, #tpu.memory_space<vmem>>, %arg6: memref<2x8x256xf32, #tpu.memory_space<vmem>>, %arg7: memref<8x512xf32, #tpu.memory_space<vmem>>) attributes {dimension_semantics = [#tpu.dimension_semantics<parallel>], iteration_bounds = array<i64: 1>, scalar_prefetch = 0 : i64, scratch_operands = 1 : i64, tpu.core_type = #tpu.core_type<tc>, window_params = [{transform_indices = @transform_0, window_bounds = array<i64: 2, 4, 256>}, {pipeline_mode = #tpu.pipeline_mode<synchronous>, transform_indices = @transform_1, window_bounds = array<i64: 8, 72>}, {pipeline_mode = #tpu.pipeline_mode<synchronous>, transform_indices = @transform_2, window_bounds = array<i64: 8, 72>}, {pipeline_mode = #tpu.pipeline_mode<synchronous>, transform_indices = @transform_3, window_bounds = array<i64: 8, 2>}, {pipeline_mode = #tpu.pipeline_mode<synchronous>, transform_indices = @transform_4, window_bounds = array<i64: 9, 512>}, {transform_indices = @transform_5, window_bounds = array<i64: 2, 8, 256>}]} {
    %c0 = arith.constant 0 : index
    %c0_0 = arith.constant 0 : index
    %c0_1 = arith.constant 0 : index
    %0 = vector.load %arg1[%c0, %c0_0, %c0_1] : memref<2x4x256xf32, #tpu.memory_space<vmem>>, vector<1x4x256xf32>
    %1 = vector.shape_cast %0 : vector<1x4x256xf32> to vector<4x256xf32>
    %c1 = arith.constant 1 : index
    %c0_2 = arith.constant 0 : index
    %c0_3 = arith.constant 0 : index
    %2 = vector.load %arg1[%c1, %c0_2, %c0_3] : memref<2x4x256xf32, #tpu.memory_space<vmem>>, vector<1x4x256xf32>
    %3 = vector.shape_cast %2 : vector<1x4x256xf32> to vector<4x256xf32>
    %4 = tpu.concatenate %1, %3 in 1 : vector<4x256xf32>, vector<4x256xf32> -> vector<4x512xf32>
    %cst = arith.constant 0.000000e+00 : f32
    %5 = vector.broadcast %cst : f32 to vector<4x512xf32>
    %6 = tpu.concatenate %4, %5 in 0 : vector<4x512xf32>, vector<4x512xf32> -> vector<8x512xf32>
    %c0_4 = arith.constant 0 : index
    %c0_5 = arith.constant 0 : index
    %7 = vector.load %arg4[%c0_4, %c0_5] : memref<8x2xf32, #tpu.memory_space<vmem>>, vector<8x2xf32>
    %8 = vector.extract_strided_slice %7 {offsets = [0, 0], sizes = [8, 1], strides = [1, 1]} : vector<8x2xf32> to vector<8x1xf32>
    %9 = vector.extract_strided_slice %7 {offsets = [0, 1], sizes = [8, 1], strides = [1, 1]} : vector<8x2xf32> to vector<8x1xf32>
    %c0_6 = arith.constant 0 : index
    %c0_7 = arith.constant 0 : index
    %10 = vector.load %arg2[%c0_6, %c0_7] : memref<8x72xf32, #tpu.memory_space<vmem>>, vector<8x72xf32>
    %11 = vector.extract_strided_slice %6 {offsets = [0, 495], sizes = [8, 17], strides = [1, 1]} : vector<8x512xf32> to vector<8x17xf32>
    %12 = vector.extract_strided_slice %6 {offsets = [0, 0], sizes = [8, 495], strides = [1, 1]} : vector<8x512xf32> to vector<8x495xf32>
    %13 = tpu.concatenate %11, %12 in 1 : vector<8x17xf32>, vector<8x495xf32> -> vector<8x512xf32>
    %c0_8 = arith.constant 0 : index
    %c0_9 = arith.constant 0 : index
    %14 = vector.load %arg5[%c0_8, %c0_9] : memref<9x512xf32, #tpu.memory_space<vmem>>, vector<1x512xf32>
    %15 = vector.broadcast %14 : vector<1x512xf32> to vector<8x512xf32>
    %16 = arith.mulf %13, %15 : vector<8x512xf32>
    %17 = vector.extract_strided_slice %6 {offsets = [0, 496], sizes = [8, 16], strides = [1, 1]} : vector<8x512xf32> to vector<8x16xf32>
    %18 = vector.extract_strided_slice %6 {offsets = [0, 0], sizes = [8, 496], strides = [1, 1]} : vector<8x512xf32> to vector<8x496xf32>
    %19 = tpu.concatenate %17, %18 in 1 : vector<8x16xf32>, vector<8x496xf32> -> vector<8x512xf32>
    %c1_10 = arith.constant 1 : index
    %c0_11 = arith.constant 0 : index
    %20 = vector.load %arg5[%c1_10, %c0_11] : memref<9x512xf32, #tpu.memory_space<vmem>>, vector<1x512xf32>
    %21 = vector.broadcast %20 : vector<1x512xf32> to vector<8x512xf32>
    %22 = arith.mulf %19, %21 : vector<8x512xf32>
    %23 = vector.extract_strided_slice %6 {offsets = [0, 497], sizes = [8, 15], strides = [1, 1]} : vector<8x512xf32> to vector<8x15xf32>
    %24 = vector.extract_strided_slice %6 {offsets = [0, 0], sizes = [8, 497], strides = [1, 1]} : vector<8x512xf32> to vector<8x497xf32>
    %25 = tpu.concatenate %23, %24 in 1 : vector<8x15xf32>, vector<8x497xf32> -> vector<8x512xf32>
    %c2 = arith.constant 2 : index
    %c0_12 = arith.constant 0 : index
    %26 = vector.load %arg5[%c2, %c0_12] : memref<9x512xf32, #tpu.memory_space<vmem>>, vector<1x512xf32>
    %27 = vector.broadcast %26 : vector<1x512xf32> to vector<8x512xf32>
    %28 = arith.mulf %25, %27 : vector<8x512xf32>
    %29 = vector.extract_strided_slice %6 {offsets = [0, 511], sizes = [8, 1], strides = [1, 1]} : vector<8x512xf32> to vector<8x1xf32>
    %30 = vector.extract_strided_slice %6 {offsets = [0, 0], sizes = [8, 511], strides = [1, 1]} : vector<8x512xf32> to vector<8x511xf32>
    %31 = tpu.concatenate %29, %30 in 1 : vector<8x1xf32>, vector<8x511xf32> -> vector<8x512xf32>
    %c3 = arith.constant 3 : index
    %c0_13 = arith.constant 0 : index
    %32 = vector.load %arg5[%c3, %c0_13] : memref<9x512xf32, #tpu.memory_space<vmem>>, vector<1x512xf32>
    %33 = vector.broadcast %32 : vector<1x512xf32> to vector<8x512xf32>
    %34 = arith.mulf %31, %33 : vector<8x512xf32>
    %35 = vector.extract_strided_slice %6 {offsets = [0, 1], sizes = [8, 511], strides = [1, 1]} : vector<8x512xf32> to vector<8x511xf32>
    %36 = vector.extract_strided_slice %6 {offsets = [0, 0], sizes = [8, 1], strides = [1, 1]} : vector<8x512xf32> to vector<8x1xf32>
    %37 = tpu.concatenate %35, %36 in 1 : vector<8x511xf32>, vector<8x1xf32> -> vector<8x512xf32>
    %c5 = arith.constant 5 : index
    %c0_14 = arith.constant 0 : index
    %38 = vector.load %arg5[%c5, %c0_14] : memref<9x512xf32, #tpu.memory_space<vmem>>, vector<1x512xf32>
    %39 = vector.broadcast %38 : vector<1x512xf32> to vector<8x512xf32>
    %40 = arith.mulf %37, %39 : vector<8x512xf32>
    %41 = vector.extract_strided_slice %6 {offsets = [0, 15], sizes = [8, 497], strides = [1, 1]} : vector<8x512xf32> to vector<8x497xf32>
    %42 = vector.extract_strided_slice %6 {offsets = [0, 0], sizes = [8, 15], strides = [1, 1]} : vector<8x512xf32> to vector<8x15xf32>
    %43 = tpu.concatenate %41, %42 in 1 : vector<8x497xf32>, vector<8x15xf32> -> vector<8x512xf32>
    %c6 = arith.constant 6 : index
    %c0_15 = arith.constant 0 : index
    %44 = vector.load %arg5[%c6, %c0_15] : memref<9x512xf32, #tpu.memory_space<vmem>>, vector<1x512xf32>
    %45 = vector.broadcast %44 : vector<1x512xf32> to vector<8x512xf32>
    %46 = arith.mulf %43, %45 : vector<8x512xf32>
    %47 = vector.extract_strided_slice %6 {offsets = [0, 16], sizes = [8, 496], strides = [1, 1]} : vector<8x512xf32> to vector<8x496xf32>
    %48 = vector.extract_strided_slice %6 {offsets = [0, 0], sizes = [8, 16], strides = [1, 1]} : vector<8x512xf32> to vector<8x16xf32>
    %49 = tpu.concatenate %47, %48 in 1 : vector<8x496xf32>, vector<8x16xf32> -> vector<8x512xf32>
    %c7 = arith.constant 7 : index
    %c0_16 = arith.constant 0 : index
    %50 = vector.load %arg5[%c7, %c0_16] : memref<9x512xf32, #tpu.memory_space<vmem>>, vector<1x512xf32>
    %51 = vector.broadcast %50 : vector<1x512xf32> to vector<8x512xf32>
    %52 = arith.mulf %49, %51 : vector<8x512xf32>
    %53 = vector.extract_strided_slice %6 {offsets = [0, 17], sizes = [8, 495], strides = [1, 1]} : vector<8x512xf32> to vector<8x495xf32>
    %54 = vector.extract_strided_slice %6 {offsets = [0, 0], sizes = [8, 17], strides = [1, 1]} : vector<8x512xf32> to vector<8x17xf32>
    %55 = tpu.concatenate %53, %54 in 1 : vector<8x495xf32>, vector<8x17xf32> -> vector<8x512xf32>
    %c8 = arith.constant 8 : index
    %c0_17 = arith.constant 0 : index
    %56 = vector.load %arg5[%c8, %c0_17] : memref<9x512xf32, #tpu.memory_space<vmem>>, vector<1x512xf32>
    %57 = vector.broadcast %56 : vector<1x512xf32> to vector<8x512xf32>
    %58 = arith.mulf %55, %57 : vector<8x512xf32>
    %59 = tpu.concatenate %16, %22, %28, %34, %6, %40, %46, %52, %58 in 0 : vector<8x512xf32>, vector<8x512xf32>, vector<8x512xf32>, vector<8x512xf32>, vector<8x512xf32>, vector<8x512xf32>, vector<8x512xf32>, vector<8x512xf32>, vector<8x512xf32> -> vector<72x512xf32>
    %cst_18 = arith.constant dense<0.000000e+00> : vector<8x512xf32>
    %60 = tpu.matmul %10, %59, %cst_18 {dimension_numbers = #tpu.dot_dimension_numbers<[1], [0], [0], [1], [0, 0, 1, 1], [], []>} : vector<8x72xf32>, vector<72x512xf32>, vector<8x512xf32> -> vector<8x512xf32>
    %61 = vector.broadcast %8 : vector<8x1xf32> to vector<8x512xf32>
    %62 = arith.addf %60, %61 : vector<8x512xf32>
    %cst_19 = arith.constant 0.000000e+00 : f32
    %63 = vector.broadcast %cst_19 : f32 to vector<8x512xf32>
    %64 = arith.maximumf %62, %63 : vector<8x512xf32>
    %c0_20 = arith.constant 0 : index
    %c0_21 = arith.constant 0 : index
    %65 = vector.load %arg7[%c0_20, %c0_21] : memref<8x512xf32, #tpu.memory_space<vmem>>, vector<8x512xf32>
    tpu.vector_store %arg7[%c0_20, %c0_21], %64 {strides = array<i32>} : memref<8x512xf32, #tpu.memory_space<vmem>>, vector<8x512xf32>,
    %c0_22 = arith.constant 0 : index
    %c0_23 = arith.constant 0 : index
    %66 = vector.load %arg3[%c0_22, %c0_23] : memref<8x72xf32, #tpu.memory_space<vmem>>, vector<8x72xf32>
    %67 = vector.extract_strided_slice %64 {offsets = [0, 495], sizes = [8, 17], strides = [1, 1]} : vector<8x512xf32> to vector<8x17xf32>
    %68 = vector.extract_strided_slice %64 {offsets = [0, 0], sizes = [8, 495], strides = [1, 1]} : vector<8x512xf32> to vector<8x495xf32>
    %69 = tpu.concatenate %67, %68 in 1 : vector<8x17xf32>, vector<8x495xf32> -> vector<8x512xf32>
    %c0_24 = arith.constant 0 : index
    %c0_25 = arith.constant 0 : index
    %70 = vector.load %arg5[%c0_24, %c0_25] : memref<9x512xf32, #tpu.memory_space<vmem>>, vector<1x512xf32>
    %71 = vector.broadcast %70 : vector<1x512xf32> to vector<8x512xf32>
    %72 = arith.mulf %69, %71 : vector<8x512xf32>
    %73 = vector.extract_strided_slice %64 {offsets = [0, 496], sizes = [8, 16], strides = [1, 1]} : vector<8x512xf32> to vector<8x16xf32>
    %74 = vector.extract_strided_slice %64 {offsets = [0, 0], sizes = [8, 496], strides = [1, 1]} : vector<8x512xf32> to vector<8x496xf32>
    %75 = tpu.concatenate %73, %74 in 1 : vector<8x16xf32>, vector<8x496xf32> -> vector<8x512xf32>
    %c1_26 = arith.constant 1 : index
    %c0_27 = arith.constant 0 : index
    %76 = vector.load %arg5[%c1_26, %c0_27] : memref<9x512xf32, #tpu.memory_space<vmem>>, vector<1x512xf32>
    %77 = vector.broadcast %76 : vector<1x512xf32> to vector<8x512xf32>
    %78 = arith.mulf %75, %77 : vector<8x512xf32>
    %79 = vector.extract_strided_slice %64 {offsets = [0, 497], sizes = [8, 15], strides = [1, 1]} : vector<8x512xf32> to vector<8x15xf32>
    %80 = vector.extract_strided_slice %64 {offsets = [0, 0], sizes = [8, 497], strides = [1, 1]} : vector<8x512xf32> to vector<8x497xf32>
    %81 = tpu.concatenate %79, %80 in 1 : vector<8x15xf32>, vector<8x497xf32> -> vector<8x512xf32>
    %c2_28 = arith.constant 2 : index
    %c0_29 = arith.constant 0 : index
    %82 = vector.load %arg5[%c2_28, %c0_29] : memref<9x512xf32, #tpu.memory_space<vmem>>, vector<1x512xf32>
    %83 = vector.broadcast %82 : vector<1x512xf32> to vector<8x512xf32>
    %84 = arith.mulf %81, %83 : vector<8x512xf32>
    %85 = vector.extract_strided_slice %64 {offsets = [0, 511], sizes = [8, 1], strides = [1, 1]} : vector<8x512xf32> to vector<8x1xf32>
    %86 = vector.extract_strided_slice %64 {offsets = [0, 0], sizes = [8, 511], strides = [1, 1]} : vector<8x512xf32> to vector<8x511xf32>
    %87 = tpu.concatenate %85, %86 in 1 : vector<8x1xf32>, vector<8x511xf32> -> vector<8x512xf32>
    %c3_30 = arith.constant 3 : index
    %c0_31 = arith.constant 0 : index
    %88 = vector.load %arg5[%c3_30, %c0_31] : memref<9x512xf32, #tpu.memory_space<vmem>>, vector<1x512xf32>
    %89 = vector.broadcast %88 : vector<1x512xf32> to vector<8x512xf32>
    %90 = arith.mulf %87, %89 : vector<8x512xf32>
    %91 = vector.extract_strided_slice %64 {offsets = [0, 1], sizes = [8, 511], strides = [1, 1]} : vector<8x512xf32> to vector<8x511xf32>
    %92 = vector.extract_strided_slice %64 {offsets = [0, 0], sizes = [8, 1], strides = [1, 1]} : vector<8x512xf32> to vector<8x1xf32>
    %93 = tpu.concatenate %91, %92 in 1 : vector<8x511xf32>, vector<8x1xf32> -> vector<8x512xf32>
    %c5_32 = arith.constant 5 : index
    %c0_33 = arith.constant 0 : index
    %94 = vector.load %arg5[%c5_32, %c0_33] : memref<9x512xf32, #tpu.memory_space<vmem>>, vector<1x512xf32>
    %95 = vector.broadcast %94 : vector<1x512xf32> to vector<8x512xf32>
    %96 = arith.mulf %93, %95 : vector<8x512xf32>
    %97 = vector.extract_strided_slice %64 {offsets = [0, 15], sizes = [8, 497], strides = [1, 1]} : vector<8x512xf32> to vector<8x497xf32>
    %98 = vector.extract_strided_slice %64 {offsets = [0, 0], sizes = [8, 15], strides = [1, 1]} : vector<8x512xf32> to vector<8x15xf32>
    %99 = tpu.concatenate %97, %98 in 1 : vector<8x497xf32>, vector<8x15xf32> -> vector<8x512xf32>
    %c6_34 = arith.constant 6 : index
    %c0_35 = arith.constant 0 : index
    %100 = vector.load %arg5[%c6_34, %c0_35] : memref<9x512xf32, #tpu.memory_space<vmem>>, vector<1x512xf32>
    %101 = vector.broadcast %100 : vector<1x512xf32> to vector<8x512xf32>
    %102 = arith.mulf %99, %101 : vector<8x512xf32>
    %103 = vector.extract_strided_slice %64 {offsets = [0, 16], sizes = [8, 496], strides = [1, 1]} : vector<8x512xf32> to vector<8x496xf32>
    %104 = vector.extract_strided_slice %64 {offsets = [0, 0], sizes = [8, 16], strides = [1, 1]} : vector<8x512xf32> to vector<8x16xf32>
    %105 = tpu.concatenate %103, %104 in 1 : vector<8x496xf32>, vector<8x16xf32> -> vector<8x512xf32>
    %c7_36 = arith.constant 7 : index
    %c0_37 = arith.constant 0 : index
    %106 = vector.load %arg5[%c7_36, %c0_37] : memref<9x512xf32, #tpu.memory_space<vmem>>, vector<1x512xf32>
    %107 = vector.broadcast %106 : vector<1x512xf32> to vector<8x512xf32>
    %108 = arith.mulf %105, %107 : vector<8x512xf32>
    %109 = vector.extract_strided_slice %64 {offsets = [0, 17], sizes = [8, 495], strides = [1, 1]} : vector<8x512xf32> to vector<8x495xf32>
    %110 = vector.extract_strided_slice %64 {offsets = [0, 0], sizes = [8, 17], strides = [1, 1]} : vector<8x512xf32> to vector<8x17xf32>
    %111 = tpu.concatenate %109, %110 in 1 : vector<8x495xf32>, vector<8x17xf32> -> vector<8x512xf32>
    %c8_38 = arith.constant 8 : index
    %c0_39 = arith.constant 0 : index
    %112 = vector.load %arg5[%c8_38, %c0_39] : memref<9x512xf32, #tpu.memory_space<vmem>>, vector<1x512xf32>
    %113 = vector.broadcast %112 : vector<1x512xf32> to vector<8x512xf32>
    %114 = arith.mulf %111, %113 : vector<8x512xf32>
    %115 = tpu.concatenate %72, %78, %84, %90, %64, %96, %102, %108, %114 in 0 : vector<8x512xf32>, vector<8x512xf32>, vector<8x512xf32>, vector<8x512xf32>, vector<8x512xf32>, vector<8x512xf32>, vector<8x512xf32>, vector<8x512xf32>, vector<8x512xf32> -> vector<72x512xf32>
    %cst_40 = arith.constant dense<0.000000e+00> : vector<8x512xf32>
    %116 = tpu.matmul %66, %115, %cst_40 {dimension_numbers = #tpu.dot_dimension_numbers<[1], [0], [0], [1], [0, 0, 1, 1], [], []>} : vector<8x72xf32>, vector<72x512xf32>, vector<8x512xf32> -> vector<8x512xf32>
    %117 = vector.broadcast %9 : vector<8x1xf32> to vector<8x512xf32>
    %118 = arith.addf %116, %117 : vector<8x512xf32>
    %c0_41 = arith.constant 0 : index
    %c0_42 = arith.constant 0 : index
    %119 = vector.load %arg7[%c0_41, %c0_42] : memref<8x512xf32, #tpu.memory_space<vmem>>, vector<8x512xf32>
    %120 = arith.addf %119, %118 : vector<8x512xf32>
    %cst_43 = arith.constant 0.000000e+00 : f32
    %121 = vector.broadcast %cst_43 : f32 to vector<8x512xf32>
    %122 = arith.maximumf %120, %121 : vector<8x512xf32>
    %123 = vector.extract_strided_slice %122 {offsets = [0, 0], sizes = [8, 256], strides = [1, 1]} : vector<8x512xf32> to vector<8x256xf32>
    %c0_44 = arith.constant 0 : index
    %c0_45 = arith.constant 0 : index
    %c0_46 = arith.constant 0 : index
    %124 = vector.load %arg6[%c0_44, %c0_45, %c0_46] : memref<2x8x256xf32, #tpu.memory_space<vmem>>, vector<1x8x256xf32>
    %125 = vector.shape_cast %124 : vector<1x8x256xf32> to vector<8x256xf32>
    %126 = vector.shape_cast %123 : vector<8x256xf32> to vector<1x8x256xf32>
    tpu.vector_store %arg6[%c0_44, %c0_45, %c0_46], %126 {strides = array<i32>} : memref<2x8x256xf32, #tpu.memory_space<vmem>>, vector<1x8x256xf32>,
    %127 = vector.extract_strided_slice %122 {offsets = [0, 256], sizes = [8, 256], strides = [1, 1]} : vector<8x512xf32> to vector<8x256xf32>
    %c1_47 = arith.constant 1 : index
    %c0_48 = arith.constant 0 : index
    %c0_49 = arith.constant 0 : index
    %128 = vector.load %arg6[%c1_47, %c0_48, %c0_49] : memref<2x8x256xf32, #tpu.memory_space<vmem>>, vector<1x8x256xf32>
    %129 = vector.shape_cast %128 : vector<1x8x256xf32> to vector<8x256xf32>
    %130 = vector.shape_cast %127 : vector<8x256xf32> to vector<1x8x256xf32>
    tpu.vector_store %arg6[%c1_47, %c0_48, %c0_49], %130 {strides = array<i32>} : memref<2x8x256xf32, #tpu.memory_space<vmem>>, vector<1x8x256xf32>,
    return
  }
  func.func @transform_0(%arg0: i32) -> (i32, i32, i32) {
    %c0_i32 = arith.constant 0 : i32
    %c0_i32_0 = arith.constant 0 : i32
    %c0_i32_1 = arith.constant 0 : i32
    return %arg0, %c0_i32, %c0_i32_0 : i32, i32, i32
  }
  func.func @transform_1(%arg0: i32) -> (i32, i32) {
    %c0_i32 = arith.constant 0 : i32
    %c0_i32_0 = arith.constant 0 : i32
    %c0_i32_1 = arith.constant 0 : i32
    return %c0_i32, %c0_i32_0 : i32, i32
  }
  func.func @transform_2(%arg0: i32) -> (i32, i32) {
    %c0_i32 = arith.constant 0 : i32
    %c0_i32_0 = arith.constant 0 : i32
    %c0_i32_1 = arith.constant 0 : i32
    return %c0_i32, %c0_i32_0 : i32, i32
  }
  func.func @transform_3(%arg0: i32) -> (i32, i32) {
    %c0_i32 = arith.constant 0 : i32
    %c0_i32_0 = arith.constant 0 : i32
    %c0_i32_1 = arith.constant 0 : i32
    return %c0_i32, %c0_i32_0 : i32, i32
  }
  func.func @transform_4(%arg0: i32) -> (i32, i32) {
    %c0_i32 = arith.constant 0 : i32
    %c0_i32_0 = arith.constant 0 : i32
    %c0_i32_1 = arith.constant 0 : i32
    return %c0_i32, %c0_i32_0 : i32, i32
  }
  func.func @transform_5(%arg0: i32) -> (i32, i32, i32) {
    %c0_i32 = arith.constant 0 : i32
    %c0_i32_0 = arith.constant 0 : i32
    %c0_i32_1 = arith.constant 0 : i32
    return %arg0, %c0_i32, %c0_i32_0 : i32, i32, i32
  }
}

</mosaic_0001>

<llo_original>
// kernel: tpu_custom_call.1
$region0: #{tpu_custom_call.1}
  #allocation0 [shape = 'u32[]', space=smem, size = 0x4, offset = 0x4, fixed_abs, tag = 'smem constant byte address 0x4 - core index']
  #allocation1 [shape = 'u32[144,128]{1,0:T(1,128)}', space=vmem, size = 0x12000, scoped, tag = 'internal scratch']
  #allocation2 [shape = 'f32[8,512]{1,0:T(8,128)}', space=vmem, size = 0x4000, scoped, tag = 'scratch operand']
  %s0 = inlined_call_operand.hbm [shape: f32[2,4,256], index: 0, kind: input, shape index: {}]
  %s1 = inlined_call_operand.vmem [shape: f32[8,72], index: 1, kind: input, shape index: {}]
  %s2 = inlined_call_operand.vmem [shape: f32[8,72], index: 2, kind: input, shape index: {}]
  %s3 = inlined_call_operand.vmem [shape: f32[8,2], index: 3, kind: input, shape index: {}]
  %s4 = inlined_call_operand.hbm [shape: f32[9,512], index: 4, kind: input, shape index: {}]
  %s5 = inlined_call_operand.hbm [shape: f32[2,8,256], index: 5, kind: output, shape index: {}]
  %s6 = sld [smem:[#allocation0]]
  $region38: #{tpu_custom_call.1} parent=0
    _
  %s8 = ssub.s32 1, %s6
  %s9 = scalar_select 0, %s8, %s6
  $region1: #{tpu_custom_call.1} parent=0
    #allocation3 [shape = 'u8[8192]{0}', space=vmem, size = 0x2000, scoped, tag = 'input window, operand 0, single buffered']
    #allocation4 [shape = 's32[1]{0}', space=sflag, size = 0x4, scoped, tag = 'scoped memory for tpu_custom_call.1']
    #allocation5 [shape = 's32[1]{0}', space=sflag, size = 0x4, scoped, tag = 'scoped memory for tpu_custom_call.1']
    #allocation6 [shape = 'u8[32768]{0}', space=vmem, size = 0x8000, scoped, tag = 'input window, operand 4, single buffered']
    #allocation7 [shape = 's32[1]{0}', space=sflag, size = 0x4, scoped, tag = 'scoped memory for tpu_custom_call.1']
    #allocation8 [shape = 'u8[16384]{0}', space=vmem, size = 0x4000, scoped, tag = 'output window, operand 0, single buffered']
    %10 = vsyncpa [#allocation4], 0
    %11 = vsyncpa [#allocation7], 0
    %12 = vsyncpa [#allocation5], 0
    // Predicated region
    $region2: #{tpu_custom_call.1} parent=1 // pred_check
      _
    $region3: #{tpu_custom_call.1} parent=1 // pred_check_branch
      %14 = sbr.rel (0) target = $region5
    $region4: #{tpu_custom_call.1} parent=1 // pred_region
      %s16 = ssub.s32 256, 256
      %17 = vsyncadd [#allocation4], %s16
      %s18 = sshll.u32 [#allocation3], 4
      %s19 = int_to_ptr.vmem [resolvable:$true] %s18
      %24 = dma.hbm_to_vmem [thread:$0]  %s0, 256, %s19, [#allocation4], 128, 128, 8
    $region5: #{tpu_custom_call.1} parent=1 // pred_fallthru
      _
    // Predicated region
    $region6: #{tpu_custom_call.1} parent=1 // pred_check
      _
    $region7: #{tpu_custom_call.1} parent=1 // pred_check_branch
      %26 = sbr.rel (0) target = $region9
    $region8: #{tpu_custom_call.1} parent=1 // pred_region
      _
    $region9: #{tpu_custom_call.1} parent=1 // pred_fallthru
      _
    // Predicated region
    $region10: #{tpu_custom_call.1} parent=1 // pred_check
      _
    $region11: #{tpu_custom_call.1} parent=1 // pred_check_branch
      %28 = sbr.rel (0) target = $region13
    $region12: #{tpu_custom_call.1} parent=1 // pred_region
      _
    $region13: #{tpu_custom_call.1} parent=1 // pred_fallthru
      _
    // Predicated region
    $region14: #{tpu_custom_call.1} parent=1 // pred_check
      _
    $region15: #{tpu_custom_call.1} parent=1 // pred_check_branch
      %30 = sbr.rel (0) target = $region17
    $region16: #{tpu_custom_call.1} parent=1 // pred_region
      _
    $region17: #{tpu_custom_call.1} parent=1 // pred_fallthru
      _
    // Predicated region
    $region18: #{tpu_custom_call.1} parent=1 // pred_check
      _
    $region19: #{tpu_custom_call.1} parent=1 // pred_check_branch
      %32 = sbr.rel (0) target = $region21
    $region20: #{tpu_custom_call.1} parent=1 // pred_region
      %s34 = ssub.s32 1024, 1024
      %35 = vsyncadd [#allocation7], %s34
      %s36 = sshll.u32 [#allocation6], 4
      %s37 = int_to_ptr.vmem [resolvable:$true] %s36
      %42 = dma.hbm_to_vmem [thread:$0]  %s4, 1024, %s37, [#allocation7], 512, 512, 32
    $region21: #{tpu_custom_call.1} parent=1 // pred_fallthru
      _
    // Predicated region
    $region22: #{tpu_custom_call.1} parent=1 // pred_check
      _
    $region23: #{tpu_custom_call.1} parent=1 // pred_check_branch
      %44 = sbr.rel (0) target = $region25
    $region24: #{tpu_custom_call.1} parent=1 // pred_region
      %45 = dma.done [#allocation4], 256
    $region25: #{tpu_custom_call.1} parent=1 // pred_fallthru
      _
    // Predicated region
    $region26: #{tpu_custom_call.1} parent=1 // pred_check
      _
    $region27: #{tpu_custom_call.1} parent=1 // pred_check_branch
      %47 = sbr.rel (0) target = $region29
    $region28: #{tpu_custom_call.1} parent=1 // pred_region
      %48 = dma.done [#allocation7], 1024
    $region29: #{tpu_custom_call.1} parent=1 // pred_fallthru
      _
    %v49 = vld [vmem:[#allocation3] sm:$0xff]
    %s50 = scalar_lea.vmem [#allocation3], 8
    %v51 = vld [vmem:[%s50] sm:$0xff]
    %v53 = vcombine.high %v49, %v49
    %v56 = vcombine.high %v51, %v51
    %vm58 = vcmask 1043456
    %v59 = vsel %vm58, %v49, 0.0
    %v60 = vsel %vm58, %v53, 0.0
    %v61 = vsel %vm58, %v51, 0.0
    %v62 = vsel %vm58, %v56, 0.0
    %v63 = vld [vmem:[%s3] sm:$0xff]
    %v64 = vld [vmem:[%s1] sm:$0xff]
    %66 = vrot.lane.b32.xlu0 %v62, 17
    %v67 = vpop.permute.xlu0 %66
    %72 = vrot.lane.b32.xlu0 %v59, 17
    %v73 = vpop.permute.xlu0 %72
    %74 = vrot.lane.b32.xlu0 %v60, 17
    %v75 = vpop.permute.xlu0 %74
    %76 = vrot.lane.b32.xlu0 %v61, 17
    %v77 = vpop.permute.xlu0 %76
    %vm78 = vcmask 138240
    %v79 = vsel %vm78, %v73, %v75
    %v80 = vsel %vm78, %v75, %v77
    %v81 = vsel %vm78, %v77, %v67
    %v86 = vsel %vm78, %v67, %v73
    %v87 = vld [vmem:[#allocation6] ss:$8 sm:$0xf]
    %v89 = vlaneseq
    %v90 = vshrl.u32 %v89, 7
    %v91 = vsub.s32 0, %v90
    %v92 = vrot.slane %v87, %v91
    %v93 = vlaneseq
    %v94 = vshrl.u32 %v93, 7
    %v95 = vsub.s32 1, %v94
    %v96 = vrot.slane %v87, %v95
    %v97 = vlaneseq
    %v98 = vshrl.u32 %v97, 7
    %v99 = vsub.s32 2, %v98
    %v100 = vrot.slane %v87, %v99
    %v101 = vlaneseq
    %v102 = vshrl.u32 %v101, 7
    %v103 = vsub.s32 3, %v102
    %v104 = vrot.slane %v87, %v103
    %v109 = vmul.f32 %v86, %v92
    %v110 = vmul.f32 %v79, %v96
    %v111 = vmul.f32 %v80, %v100
    %v112 = vmul.f32 %v81, %v104
    %113 = vrot.lane.b32.xlu0 %v62, 16
    %v114 = vpop.permute.xlu0 %113
    %116 = vrot.lane.b32.xlu0 %v59, 16
    %v117 = vpop.permute.xlu0 %116
    %118 = vrot.lane.b32.xlu0 %v60, 16
    %v119 = vpop.permute.xlu0 %118
    %120 = vrot.lane.b32.xlu0 %v61, 16
    %v121 = vpop.permute.xlu0 %120
    %vm122 = vcmask 130048
    %v123 = vsel %vm122, %v117, %v119
    %v124 = vsel %vm122, %v119, %v121
    %v125 = vsel %vm122, %v121, %v114
    %v130 = vsel %vm122, %v114, %v117
    %s131 = scalar_lea.vmem [#allocation6], 1
    %v132 = vld [vmem:[%s131] ss:$8 sm:$0xf]
    %v134 = vlaneseq
    %v135 = vshrl.u32 %v134, 7
    %v136 = vsub.s32 0, %v135
    %v137 = vrot.slane %v132, %v136
    %v138 = vlaneseq
    %v139 = vshrl.u32 %v138, 7
    %v140 = vsub.s32 1, %v139
    %v141 = vrot.slane %v132, %v140
    %v142 = vlaneseq
    %v143 = vshrl.u32 %v142, 7
    %v144 = vsub.s32 2, %v143
    %v145 = vrot.slane %v132, %v144
    %v146 = vlaneseq
    %v147 = vshrl.u32 %v146, 7
    %v148 = vsub.s32 3, %v147
    %v149 = vrot.slane %v132, %v148
    %v154 = vmul.f32 %v130, %v137
    %v155 = vmul.f32 %v123, %v141
    %v156 = vmul.f32 %v124, %v145
    %v157 = vmul.f32 %v125, %v149
    %158 = vrot.lane.b32.xlu0 %v62, 15
    %v159 = vpop.permute.xlu0 %158
    %161 = vrot.lane.b32.xlu0 %v59, 15
    %v162 = vpop.permute.xlu0 %161
    %163 = vrot.lane.b32.xlu0 %v60, 15
    %v164 = vpop.permute.xlu0 %163
    %165 = vrot.lane.b32.xlu0 %v61, 15
    %v166 = vpop.permute.xlu0 %165
    %vm167 = vcmask 121856
    %v168 = vsel %vm167, %v162, %v164
    %v169 = vsel %vm167, %v164, %v166
    %v170 = vsel %vm167, %v166, %v159
    %v175 = vsel %vm167, %v159, %v162
    %s176 = scalar_lea.vmem [#allocation6], 2
    %v177 = vld [vmem:[%s176] ss:$8 sm:$0xf]
    %v179 = vlaneseq
    %v180 = vshrl.u32 %v179, 7
    %v181 = vsub.s32 0, %v180
    %v182 = vrot.slane %v177, %v181
    %v183 = vlaneseq
    %v184 = vshrl.u32 %v183, 7
    %v185 = vsub.s32 1, %v184
    %v186 = vrot.slane %v177, %v185
    %v187 = vlaneseq
    %v188 = vshrl.u32 %v187, 7
    %v189 = vsub.s32 2, %v188
    %v190 = vrot.slane %v177, %v189
    %v191 = vlaneseq
    %v192 = vshrl.u32 %v191, 7
    %v193 = vsub.s32 3, %v192
    %v194 = vrot.slane %v177, %v193
    %v199 = vmul.f32 %v175, %v182
    %v200 = vmul.f32 %v168, %v186
    %v201 = vmul.f32 %v169, %v190
    %v202 = vmul.f32 %v170, %v194
    %203 = vrot.lane.b32.xlu0 %v62, 1
    %v204 = vpop.permute.xlu0 %203
    %206 = vrot.lane.b32.xlu0 %v59, 1
    %v207 = vpop.permute.xlu0 %206
    %208 = vrot.lane.b32.xlu0 %v60, 1
    %v209 = vpop.permute.xlu0 %208
    %210 = vrot.lane.b32.xlu0 %v61, 1
    %v211 = vpop.permute.xlu0 %210
    %vm212 = vcmask 7168
    %v213 = vsel %vm212, %v207, %v209
    %v214 = vsel %vm212, %v209, %v211
    %v215 = vsel %vm212, %v211, %v204
    %v220 = vsel %vm212, %v204, %v207
    %s221 = scalar_lea.vmem [#allocation6], 3
    %v222 = vld [vmem:[%s221] ss:$8 sm:$0xf]
    %v224 = vlaneseq
    %v225 = vshrl.u32 %v224, 7
    %v226 = vsub.s32 0, %v225
    %v227 = vrot.slane %v222, %v226
    %v228 = vlaneseq
    %v229 = vshrl.u32 %v228, 7
    %v230 = vsub.s32 1, %v229
    %v231 = vrot.slane %v222, %v230
    %v232 = vlaneseq
    %v233 = vshrl.u32 %v232, 7
    %v234 = vsub.s32 2, %v233
    %v235 = vrot.slane %v222, %v234
    %v236 = vlaneseq
    %v237 = vshrl.u32 %v236, 7
    %v238 = vsub.s32 3, %v237
    %v239 = vrot.slane %v222, %v238
    %v244 = vmul.f32 %v220, %v227
    %v245 = vmul.f32 %v213, %v231
    %v246 = vmul.f32 %v214, %v235
    %v247 = vmul.f32 %v215, %v239
    %248 = vrot.lane.b32.xlu0 %v59, 127
    %v249 = vpop.permute.xlu0 %248
    %250 = vrot.lane.b32.xlu0 %v60, 127
    %v251 = vpop.permute.xlu0 %250
    %252 = vrot.lane.b32.xlu0 %v61, 127
    %v253 = vpop.permute.xlu0 %252
    %254 = vrot.lane.b32.xlu0 %v62, 127
    %v255 = vpop.permute.xlu0 %254
    %vm256 = vcmask 1039360
    %v257 = vsel %vm256, %v249, %v251
    %v258 = vsel %vm256, %v251, %v253
    %v259 = vsel %vm256, %v253, %v255
    %v265 = vsel %vm256, %v255, %v249
    %s266 = scalar_lea.vmem [#allocation6], 5
    %v267 = vld [vmem:[%s266] ss:$8 sm:$0xf]
    %v269 = vlaneseq
    %v270 = vshrl.u32 %v269, 7
    %v271 = vsub.s32 0, %v270
    %v272 = vrot.slane %v267, %v271
    %v273 = vlaneseq
    %v274 = vshrl.u32 %v273, 7
    %v275 = vsub.s32 1, %v274
    %v276 = vrot.slane %v267, %v275
    %v277 = vlaneseq
    %v278 = vshrl.u32 %v277, 7
    %v279 = vsub.s32 2, %v278
    %v280 = vrot.slane %v267, %v279
    %v281 = vlaneseq
    %v282 = vshrl.u32 %v281, 7
    %v283 = vsub.s32 3, %v282
    %v284 = vrot.slane %v267, %v283
    %v289 = vmul.f32 %v257, %v272
    %v290 = vmul.f32 %v258, %v276
    %v291 = vmul.f32 %v259, %v280
    %v292 = vmul.f32 %v265, %v284
    %293 = vrot.lane.b32.xlu0 %v59, 113
    %v294 = vpop.permute.xlu0 %293
    %295 = vrot.lane.b32.xlu0 %v60, 113
    %v296 = vpop.permute.xlu0 %295
    %297 = vrot.lane.b32.xlu0 %v61, 113
    %v298 = vpop.permute.xlu0 %297
    %299 = vrot.lane.b32.xlu0 %v62, 113
    %v300 = vpop.permute.xlu0 %299
    %vm301 = vcmask 924672
    %v302 = vsel %vm301, %v294, %v296
    %v303 = vsel %vm301, %v296, %v298
    %v304 = vsel %vm301, %v298, %v300
    %v310 = vsel %vm301, %v300, %v294
    %s311 = scalar_lea.vmem [#allocation6], 6
    %v312 = vld [vmem:[%s311] ss:$8 sm:$0xf]
    %v314 = vlaneseq
    %v315 = vshrl.u32 %v314, 7
    %v316 = vsub.s32 0, %v315
    %v317 = vrot.slane %v312, %v316
    %v318 = vlaneseq
    %v319 = vshrl.u32 %v318, 7
    %v320 = vsub.s32 1, %v319
    %v321 = vrot.slane %v312, %v320
    %v322 = vlaneseq
    %v323 = vshrl.u32 %v322, 7
    %v324 = vsub.s32 2, %v323
    %v325 = vrot.slane %v312, %v324
    %v326 = vlaneseq
    %v327 = vshrl.u32 %v326, 7
    %v328 = vsub.s32 3, %v327
    %v329 = vrot.slane %v312, %v328
    %v334 = vmul.f32 %v302, %v317
    %v335 = vmul.f32 %v303, %v321
    %v336 = vmul.f32 %v304, %v325
    %v337 = vmul.f32 %v310, %v329
    %338 = vrot.lane.b32.xlu0 %v59, 112
    %v339 = vpop.permute.xlu0 %338
    %340 = vrot.lane.b32.xlu0 %v60, 112
    %v341 = vpop.permute.xlu0 %340
    %342 = vrot.lane.b32.xlu0 %v61, 112
    %v343 = vpop.permute.xlu0 %342
    %344 = vrot.lane.b32.xlu0 %v62, 112
    %v345 = vpop.permute.xlu0 %344
    %vm346 = vcmask 916480
    %v347 = vsel %vm346, %v339, %v341
    %v348 = vsel %vm346, %v341, %v343
    %v349 = vsel %vm346, %v343, %v345
    %v355 = vsel %vm346, %v345, %v339
    %s356 = scalar_lea.vmem [#allocation6], 7
    %v357 = vld [vmem:[%s356] ss:$8 sm:$0xf]
    %v359 = vlaneseq
    %v360 = vshrl.u32 %v359, 7
    %v361 = vsub.s32 0, %v360
    %v362 = vrot.slane %v357, %v361
    %v363 = vlaneseq
    %v364 = vshrl.u32 %v363, 7
    %v365 = vsub.s32 1, %v364
    %v366 = vrot.slane %v357, %v365
    %v367 = vlaneseq
    %v368 = vshrl.u32 %v367, 7
    %v369 = vsub.s32 2, %v368
    %v370 = vrot.slane %v357, %v369
    %v371 = vlaneseq
    %v372 = vshrl.u32 %v371, 7
    %v373 = vsub.s32 3, %v372
    %v374 = vrot.slane %v357, %v373
    %v379 = vmul.f32 %v347, %v362
    %v380 = vmul.f32 %v348, %v366
    %v381 = vmul.f32 %v349, %v370
    %v382 = vmul.f32 %v355, %v374
    %383 = vrot.lane.b32.xlu0 %v59, 111
    %v384 = vpop.permute.xlu0 %383
    %385 = vrot.lane.b32.xlu0 %v60, 111
    %v386 = vpop.permute.xlu0 %385
    %387 = vrot.lane.b32.xlu0 %v61, 111
    %v388 = vpop.permute.xlu0 %387
    %389 = vrot.lane.b32.xlu0 %v62, 111
    %v390 = vpop.permute.xlu0 %389
    %vm391 = vcmask 908288
    %v392 = vsel %vm391, %v384, %v386
    %v393 = vsel %vm391, %v386, %v388
    %v394 = vsel %vm391, %v388, %v390
    %v400 = vsel %vm391, %v390, %v384
    %s401 = scalar_lea.vmem [#allocation6], 32
    %v402 = vld [vmem:[%s401] ss:$8 sm:$0xf]
    %v404 = vlaneseq
    %v405 = vshrl.u32 %v404, 7
    %v406 = vsub.s32 0, %v405
    %v407 = vrot.slane %v402, %v406
    %v408 = vlaneseq
    %v409 = vshrl.u32 %v408, 7
    %v410 = vsub.s32 1, %v409
    %v411 = vrot.slane %v402, %v410
    %v412 = vlaneseq
    %v413 = vshrl.u32 %v412, 7
    %v414 = vsub.s32 2, %v413
    %v415 = vrot.slane %v402, %v414
    %v416 = vlaneseq
    %v417 = vshrl.u32 %v416, 7
    %v418 = vsub.s32 3, %v417
    %v419 = vrot.slane %v402, %v418
    %v424 = vmul.f32 %v392, %v407
    %v425 = vmul.f32 %v393, %v411
    %v426 = vmul.f32 %v394, %v415
    %v427 = vmul.f32 %v400, %v419
    %429 = vset.pattern.permute.xlu0 0
    %430 = vperm.xlu0 %429, %v63
    %v431 = vpop.permute.xlu0 %430
    %vm433 = vcmask 588800
    %v435 = vsel %vm433, %v64, 0
    %437 = vmatprep.subr.mxu0 %v110
    %438 = vmatpush1.msra.mxu0 %v109
    %439 = vmatprep.subr.mxu0 %v155
    %440 = vmatpush1.msra.mxu0 %v154
    %441 = vmatprep.subr.mxu0 %v200
    %442 = vmatpush1.msra.mxu0 %v199
    %443 = vmatprep.subr.mxu0 %v245
    %444 = vmatpush1.msra.mxu0 %v244
    %445 = vmatprep.subr.mxu0 %v60
    %446 = vmatpush1.msra.mxu0 %v59
    %447 = vmatprep.subr.mxu0 %v290
    %448 = vmatpush1.msra.mxu0 %v289
    %449 = vmatprep.subr.mxu0 %v335
    %450 = vmatpush1.msra.mxu0 %v334
    %451 = vmatprep.subr.mxu0 %v380
    %452 = vmatpush1.msra.mxu0 %v379
    %453 = vmatprep.subr.mxu0 %v425
    %454 = vmatpush1.msra.mxu0 %v424
    %455 = vmatprep.subr.mxu0 0.0
    %456 = vmatpush1.msra.mxu0 0.0
    %457 = vmatprep.subr.mxu0 0.0
    %458 = vmatpush1.msra.mxu0 0.0
    %459 = vmatprep.subr.mxu0 0.0
    %460 = vmatpush1.msra.mxu0 0.0
    %461 = vmatprep.subr.mxu0 0.0
    %462 = vmatpush1.msra.mxu0 0.0
    %463 = vmatprep.subr.mxu0 0.0
    %464 = vmatpush1.msra.mxu0 0.0
    %465 = vmatprep.subr.mxu0 0.0
    %466 = vmatpush1.msra.mxu0 0.0
    %467 = vmatprep.subr.mxu0 0.0
    %468 = vmatpush1.msra.mxu0 0.0
    %469 = vmatprep.subr.mxu0 0.0
    %470 = vmatpush1.msra.mxu0 0.0
    %471 = vmatprep.subr.mxu0 0.0
    %472 = vmatpush1.msra.mxu0 0.0
    %473 = vmatprep.subr.mxu0 0.0
    %474 = vmatpush1.msra.mxu0 0.0
    %475 = vmatprep.subr.mxu0 0.0
    %476 = vmatpush1.msra.mxu0 0.0
    %477 = vmatprep.subr.mxu0 0.0
    %478 = vmatpush1.msra.mxu0 0.0
    %479 = vmatprep.subr.mxu0 0.0
    %480 = vmatpush1.msra.mxu0 0.0
    %481 = vmatprep.subr.mxu0 0.0
    %482 = vmatpush1.msra.mxu0 0.0
    %483 = vmatprep.subr.mxu0 0.0
    %484 = vmatpush1.msra.mxu0 0.0
    %485 = vmatprep.subr.mxu0 0.0
    %486 = vmatpush1.msra.mxu0 0.0
    %487 = vmatprep.subr.mxu0 0.0
    %488 = vmatpush1.msra.mxu0 0.0
    %489 = vmatprep.subr.mxu0 0.0
    %490 = vmatpush1.msra.mxu0 0.0
    %491 = vmatprep.subr.mxu0 0.0
    %492 = vmatpush1.msra.mxu0 0.0
    %493 = vmatprep.subr.mxu0 0.0
    %494 = vmatpush1.msra.mxu0 0.0
    %495 = vmatprep.subr.mxu0 0.0
    %496 = vmatpush1.msra.mxu0 0.0
    %497 = vmatprep.subr.mxu0 0.0
    %498 = vmatpush1.msra.mxu0 0.0
    %499 = vmatprep.subr.mxu0 0.0
    %500 = vmatpush1.msra.mxu0 0.0
    %501 = vmatprep.mubr.f32.mxu0 0.0
    %502 = vmatmul.mubr.f32.gmra.mrb[0].mxu0 %v435
    %v503 = vpop.f32.mrb[0].mxu0
    %v504 = vadd.f32 %v431, %v503
    %v505 = vpop.f32.mrb[0].mxu0
    %v506 = vadd.f32 %v431, %v505
    %507 = vdwg.mxu0
    %508 = vmatprep.subr.mxu0 %v112
    %509 = vmatpush1.msra.mxu0 %v111
    %510 = vmatprep.subr.mxu0 %v157
    %511 = vmatpush1.msra.mxu0 %v156
    %512 = vmatprep.subr.mxu0 %v202
    %513 = vmatpush1.msra.mxu0 %v201
    %514 = vmatprep.subr.mxu0 %v247
    %515 = vmatpush1.msra.mxu0 %v246
    %516 = vmatprep.subr.mxu0 %v62
    %517 = vmatpush1.msra.mxu0 %v61
    %518 = vmatprep.subr.mxu0 %v292
    %519 = vmatpush1.msra.mxu0 %v291
    %520 = vmatprep.subr.mxu0 %v337
    %521 = vmatpush1.msra.mxu0 %v336
    %522 = vmatprep.subr.mxu0 %v382
    %523 = vmatpush1.msra.mxu0 %v381
    %524 = vmatprep.subr.mxu0 %v427
    %525 = vmatpush1.msra.mxu0 %v426
    %526 = vmatprep.subr.mxu0 0.0
    %527 = vmatpush1.msra.mxu0 0.0
    %528 = vmatprep.subr.mxu0 0.0
    %529 = vmatpush1.msra.mxu0 0.0
    %530 = vmatprep.subr.mxu0 0.0
    %531 = vmatpush1.msra.mxu0 0.0
    %532 = vmatprep.subr.mxu0 0.0
    %533 = vmatpush1.msra.mxu0 0.0
    %534 = vmatprep.subr.mxu0 0.0
    %535 = vmatpush1.msra.mxu0 0.0
    %536 = vmatprep.subr.mxu0 0.0
    %537 = vmatpush1.msra.mxu0 0.0
    %538 = vmatprep.subr.mxu0 0.0
    %539 = vmatpush1.msra.mxu0 0.0
    %540 = vmatprep.subr.mxu0 0.0
    %541 = vmatpush1.msra.mxu0 0.0
    %542 = vmatprep.subr.mxu0 0.0
    %543 = vmatpush1.msra.mxu0 0.0
    %544 = vmatprep.subr.mxu0 0.0
    %545 = vmatpush1.msra.mxu0 0.0
    %546 = vmatprep.subr.mxu0 0.0
    %547 = vmatpush1.msra.mxu0 0.0
    %548 = vmatprep.subr.mxu0 0.0
    %549 = vmatpush1.msra.mxu0 0.0
    %550 = vmatprep.subr.mxu0 0.0
    %551 = vmatpush1.msra.mxu0 0.0
    %552 = vmatprep.subr.mxu0 0.0
    %553 = vmatpush1.msra.mxu0 0.0
    %554 = vmatprep.subr.mxu0 0.0
    %555 = vmatpush1.msra.mxu0 0.0
    %556 = vmatprep.subr.mxu0 0.0
    %557 = vmatpush1.msra.mxu0 0.0
    %558 = vmatprep.subr.mxu0 0.0
    %559 = vmatpush1.msra.mxu0 0.0
    %560 = vmatprep.subr.mxu0 0.0
    %561 = vmatpush1.msra.mxu0 0.0
    %562 = vmatprep.subr.mxu0 0.0
    %563 = vmatpush1.msra.mxu0 0.0
    %564 = vmatprep.subr.mxu0 0.0
    %565 = vmatpush1.msra.mxu0 0.0
    %566 = vmatprep.subr.mxu0 0.0
    %567 = vmatpush1.msra.mxu0 0.0
    %568 = vmatprep.subr.mxu0 0.0
    %569 = vmatpush1.msra.mxu0 0.0
    %570 = vmatprep.subr.mxu0 0.0
    %571 = vmatpush1.msra.mxu0 0.0
    %572 = vmatprep.mubr.f32.mxu0 0.0
    %573 = vmatmul.mubr.f32.gmra.mrb[0].mxu0 %v435
    %v574 = vpop.f32.mrb[0].mxu0
    %v575 = vadd.f32 %v431, %v574
    %v576 = vpop.f32.mrb[0].mxu0
    %v577 = vadd.f32 %v431, %v576
    %578 = vdwg.mxu0
    %v579 = vmax.f32 %v504, 0.0
    %v580 = vmax.f32 %v506, 0.0
    %v581 = vmax.f32 %v575, 0.0
    %v582 = vmax.f32 %v577, 0.0
    %583 = vst [vmem:[#allocation2] sm:$0xff] %v579
    %584 = vst [vmem:[#allocation2 + $0x8] sm:$0xff] %v580
    %585 = vst [vmem:[#allocation2 + $0x10] sm:$0xff] %v581
    %586 = vst [vmem:[#allocation2 + $0x18] sm:$0xff] %v582
    %v587 = vld [vmem:[%s2] sm:$0xff]
    %589 = vrot.lane.b32.xlu0 %v582, 17
    %v590 = vpop.permute.xlu0 %589
    %595 = vrot.lane.b32.xlu0 %v579, 17
    %v596 = vpop.permute.xlu0 %595
    %597 = vrot.lane.b32.xlu0 %v580, 17
    %v598 = vpop.permute.xlu0 %597
    %599 = vrot.lane.b32.xlu0 %v581, 17
    %v600 = vpop.permute.xlu0 %599
    %v601 = vsel %vm78, %v596, %v598
    %v602 = vsel %vm78, %v598, %v600
    %v603 = vsel %vm78, %v600, %v590
    %v608 = vsel %vm78, %v590, %v596
    %v609 = vld [vmem:[#allocation6] ss:$8 sm:$0xf]
    %v611 = vlaneseq
    %v612 = vshrl.u32 %v611, 7
    %v613 = vsub.s32 0, %v612
    %v614 = vrot.slane %v609, %v613
    %v615 = vlaneseq
    %v616 = vshrl.u32 %v615, 7
    %v617 = vsub.s32 1, %v616
    %v618 = vrot.slane %v609, %v617
    %v619 = vlaneseq
    %v620 = vshrl.u32 %v619, 7
    %v621 = vsub.s32 2, %v620
    %v622 = vrot.slane %v609, %v621
    %v623 = vlaneseq
    %v624 = vshrl.u32 %v623, 7
    %v625 = vsub.s32 3, %v624
    %v626 = vrot.slane %v609, %v625
    %v631 = vmul.f32 %v608, %v614
    %v632 = vmul.f32 %v601, %v618
    %v633 = vmul.f32 %v602, %v622
    %v634 = vmul.f32 %v603, %v626
    %635 = vrot.lane.b32.xlu0 %v582, 16
    %v636 = vpop.permute.xlu0 %635
    %638 = vrot.lane.b32.xlu0 %v579, 16
    %v639 = vpop.permute.xlu0 %638
    %640 = vrot.lane.b32.xlu0 %v580, 16
    %v641 = vpop.permute.xlu0 %640
    %642 = vrot.lane.b32.xlu0 %v581, 16
    %v643 = vpop.permute.xlu0 %642
    %v644 = vsel %vm122, %v639, %v641
    %v645 = vsel %vm122, %v641, %v643
    %v646 = vsel %vm122, %v643, %v636
    %v651 = vsel %vm122, %v636, %v639
    %v652 = vld [vmem:[%s131] ss:$8 sm:$0xf]
    %v654 = vlaneseq
    %v655 = vshrl.u32 %v654, 7
    %v656 = vsub.s32 0, %v655
    %v657 = vrot.slane %v652, %v656
    %v658 = vlaneseq
    %v659 = vshrl.u32 %v658, 7
    %v660 = vsub.s32 1, %v659
    %v661 = vrot.slane %v652, %v660
    %v662 = vlaneseq
    %v663 = vshrl.u32 %v662, 7
    %v664 = vsub.s32 2, %v663
    %v665 = vrot.slane %v652, %v664
    %v666 = vlaneseq
    %v667 = vshrl.u32 %v666, 7
    %v668 = vsub.s32 3, %v667
    %v669 = vrot.slane %v652, %v668
    %v674 = vmul.f32 %v651, %v657
    %v675 = vmul.f32 %v644, %v661
    %v676 = vmul.f32 %v645, %v665
    %v677 = vmul.f32 %v646, %v669
    %678 = vrot.lane.b32.xlu0 %v582, 15
    %v679 = vpop.permute.xlu0 %678
    %681 = vrot.lane.b32.xlu0 %v579, 15
    %v682 = vpop.permute.xlu0 %681
    %683 = vrot.lane.b32.xlu0 %v580, 15
    %v684 = vpop.permute.xlu0 %683
    %685 = vrot.lane.b32.xlu0 %v581, 15
    %v686 = vpop.permute.xlu0 %685
    %v687 = vsel %vm167, %v682, %v684
    %v688 = vsel %vm167, %v684, %v686
    %v689 = vsel %vm167, %v686, %v679
    %v694 = vsel %vm167, %v679, %v682
    %v695 = vld [vmem:[%s176] ss:$8 sm:$0xf]
    %v697 = vlaneseq
    %v698 = vshrl.u32 %v697, 7
    %v699 = vsub.s32 0, %v698
    %v700 = vrot.slane %v695, %v699
    %v701 = vlaneseq
    %v702 = vshrl.u32 %v701, 7
    %v703 = vsub.s32 1, %v702
    %v704 = vrot.slane %v695, %v703
    %v705 = vlaneseq
    %v706 = vshrl.u32 %v705, 7
    %v707 = vsub.s32 2, %v706
    %v708 = vrot.slane %v695, %v707
    %v709 = vlaneseq
    %v710 = vshrl.u32 %v709, 7
    %v711 = vsub.s32 3, %v710
    %v712 = vrot.slane %v695, %v711
    %v717 = vmul.f32 %v694, %v700
    %v718 = vmul.f32 %v687, %v704
    %v719 = vmul.f32 %v688, %v708
    %v720 = vmul.f32 %v689, %v712
    %721 = vrot.lane.b32.xlu0 %v582, 1
    %v722 = vpop.permute.xlu0 %721
    %724 = vrot.lane.b32.xlu0 %v579, 1
    %v725 = vpop.permute.xlu0 %724
    %726 = vrot.lane.b32.xlu0 %v580, 1
    %v727 = vpop.permute.xlu0 %726
    %728 = vrot.lane.b32.xlu0 %v581, 1
    %v729 = vpop.permute.xlu0 %728
    %v730 = vsel %vm212, %v725, %v727
    %v731 = vsel %vm212, %v727, %v729
    %v732 = vsel %vm212, %v729, %v722
    %v737 = vsel %vm212, %v722, %v725
    %v738 = vld [vmem:[%s221] ss:$8 sm:$0xf]
    %v740 = vlaneseq
    %v741 = vshrl.u32 %v740, 7
    %v742 = vsub.s32 0, %v741
    %v743 = vrot.slane %v738, %v742
    %v744 = vlaneseq
    %v745 = vshrl.u32 %v744, 7
    %v746 = vsub.s32 1, %v745
    %v747 = vrot.slane %v738, %v746
    %v748 = vlaneseq
    %v749 = vshrl.u32 %v748, 7
    %v750 = vsub.s32 2, %v749
    %v751 = vrot.slane %v738, %v750
    %v752 = vlaneseq
    %v753 = vshrl.u32 %v752, 7
    %v754 = vsub.s32 3, %v753
    %v755 = vrot.slane %v738, %v754
    %v760 = vmul.f32 %v737, %v743
    %v761 = vmul.f32 %v730, %v747
    %v762 = vmul.f32 %v731, %v751
    %v763 = vmul.f32 %v732, %v755
    %764 = vrot.lane.b32.xlu0 %v579, 127
    %v765 = vpop.permute.xlu0 %764
    %766 = vrot.lane.b32.xlu0 %v580, 127
    %v767 = vpop.permute.xlu0 %766
    %768 = vrot.lane.b32.xlu0 %v581, 127
    %v769 = vpop.permute.xlu0 %768
    %770 = vrot.lane.b32.xlu0 %v582, 127
    %v771 = vpop.permute.xlu0 %770
    %v772 = vsel %vm256, %v765, %v767
    %v773 = vsel %vm256, %v767, %v769
    %v774 = vsel %vm256, %v769, %v771
    %v780 = vsel %vm256, %v771, %v765
    %v781 = vld [vmem:[%s266] ss:$8 sm:$0xf]
    %v783 = vlaneseq
    %v784 = vshrl.u32 %v783, 7
    %v785 = vsub.s32 0, %v784
    %v786 = vrot.slane %v781, %v785
    %v787 = vlaneseq
    %v788 = vshrl.u32 %v787, 7
    %v789 = vsub.s32 1, %v788
    %v790 = vrot.slane %v781, %v789
    %v791 = vlaneseq
    %v792 = vshrl.u32 %v791, 7
    %v793 = vsub.s32 2, %v792
    %v794 = vrot.slane %v781, %v793
    %v795 = vlaneseq
    %v796 = vshrl.u32 %v795, 7
    %v797 = vsub.s32 3, %v796
    %v798 = vrot.slane %v781, %v797
    %v803 = vmul.f32 %v772, %v786
    %v804 = vmul.f32 %v773, %v790
    %v805 = vmul.f32 %v774, %v794
    %v806 = vmul.f32 %v780, %v798
    %807 = vrot.lane.b32.xlu0 %v579, 113
    %v808 = vpop.permute.xlu0 %807
    %809 = vrot.lane.b32.xlu0 %v580, 113
    %v810 = vpop.permute.xlu0 %809
    %811 = vrot.lane.b32.xlu0 %v581, 113
    %v812 = vpop.permute.xlu0 %811
    %813 = vrot.lane.b32.xlu0 %v582, 113
    %v814 = vpop.permute.xlu0 %813
    %v815 = vsel %vm301, %v808, %v810
    %v816 = vsel %vm301, %v810, %v812
    %v817 = vsel %vm301, %v812, %v814
    %v823 = vsel %vm301, %v814, %v808
    %v824 = vld [vmem:[%s311] ss:$8 sm:$0xf]
    %v826 = vlaneseq
    %v827 = vshrl.u32 %v826, 7
    %v828 = vsub.s32 0, %v827
    %v829 = vrot.slane %v824, %v828
    %v830 = vlaneseq
    %v831 = vshrl.u32 %v830, 7
    %v832 = vsub.s32 1, %v831
    %v833 = vrot.slane %v824, %v832
    %v834 = vlaneseq
    %v835 = vshrl.u32 %v834, 7
    %v836 = vsub.s32 2, %v835
    %v837 = vrot.slane %v824, %v836
    %v838 = vlaneseq
    %v839 = vshrl.u32 %v838, 7
    %v840 = vsub.s32 3, %v839
    %v841 = vrot.slane %v824, %v840
    %v846 = vmul.f32 %v815, %v829
    %v847 = vmul.f32 %v816, %v833
    %v848 = vmul.f32 %v817, %v837
    %v849 = vmul.f32 %v823, %v841
    %850 = vrot.lane.b32.xlu0 %v579, 112
    %v851 = vpop.permute.xlu0 %850
    %852 = vrot.lane.b32.xlu0 %v580, 112
    %v853 = vpop.permute.xlu0 %852
    %854 = vrot.lane.b32.xlu0 %v581, 112
    %v855 = vpop.permute.xlu0 %854
    %856 = vrot.lane.b32.xlu0 %v582, 112
    %v857 = vpop.permute.xlu0 %856
    %v858 = vsel %vm346, %v851, %v853
    %v859 = vsel %vm346, %v853, %v855
    %v860 = vsel %vm346, %v855, %v857
    %v866 = vsel %vm346, %v857, %v851
    %v867 = vld [vmem:[%s356] ss:$8 sm:$0xf]
    %v869 = vlaneseq
    %v870 = vshrl.u32 %v869, 7
    %v871 = vsub.s32 0, %v870
    %v872 = vrot.slane %v867, %v871
    %v873 = vlaneseq
    %v874 = vshrl.u32 %v873, 7
    %v875 = vsub.s32 1, %v874
    %v876 = vrot.slane %v867, %v875
    %v877 = vlaneseq
    %v878 = vshrl.u32 %v877, 7
    %v879 = vsub.s32 2, %v878
    %v880 = vrot.slane %v867, %v879
    %v881 = vlaneseq
    %v882 = vshrl.u32 %v881, 7
    %v883 = vsub.s32 3, %v882
    %v884 = vrot.slane %v867, %v883
    %v889 = vmul.f32 %v858, %v872
    %v890 = vmul.f32 %v859, %v876
    %v891 = vmul.f32 %v860, %v880
    %v892 = vmul.f32 %v866, %v884
    %893 = vrot.lane.b32.xlu0 %v579, 111
    %v894 = vpop.permute.xlu0 %893
    %895 = vrot.lane.b32.xlu0 %v580, 111
    %v896 = vpop.permute.xlu0 %895
    %897 = vrot.lane.b32.xlu0 %v581, 111
    %v898 = vpop.permute.xlu0 %897
    %899 = vrot.lane.b32.xlu0 %v582, 111
    %v900 = vpop.permute.xlu0 %899
    %v901 = vsel %vm391, %v894, %v896
    %v902 = vsel %vm391, %v896, %v898
    %v903 = vsel %vm391, %v898, %v900
    %v909 = vsel %vm391, %v900, %v894
    %v910 = vld [vmem:[%s401] ss:$8 sm:$0xf]
    %v912 = vlaneseq
    %v913 = vshrl.u32 %v912, 7
    %v914 = vsub.s32 0, %v913
    %v915 = vrot.slane %v910, %v914
    %v916 = vlaneseq
    %v917 = vshrl.u32 %v916, 7
    %v918 = vsub.s32 1, %v917
    %v919 = vrot.slane %v910, %v918
    %v920 = vlaneseq
    %v921 = vshrl.u32 %v920, 7
    %v922 = vsub.s32 2, %v921
    %v923 = vrot.slane %v910, %v922
    %v924 = vlaneseq
    %v925 = vshrl.u32 %v924, 7
    %v926 = vsub.s32 3, %v925
    %v927 = vrot.slane %v910, %v926
    %v932 = vmul.f32 %v901, %v915
    %v933 = vmul.f32 %v902, %v919
    %v934 = vmul.f32 %v903, %v923
    %v935 = vmul.f32 %v909, %v927
    %936 = vset.pattern.permute.xlu0 1
    %937 = vperm.xlu0 %936, %v63
    %v938 = vpop.permute.xlu0 %937
    %v941 = vsel %vm433, %v587, 0
    %943 = vmatprep.subr.mxu0 %v632
    %944 = vmatpush1.msra.mxu0 %v631
    %945 = vmatprep.subr.mxu0 %v675
    %946 = vmatpush1.msra.mxu0 %v674
    %947 = vmatprep.subr.mxu0 %v718
    %948 = vmatpush1.msra.mxu0 %v717
    %949 = vmatprep.subr.mxu0 %v761
    %950 = vmatpush1.msra.mxu0 %v760
    %951 = vmatprep.subr.mxu0 %v580
    %952 = vmatpush1.msra.mxu0 %v579
    %953 = vmatprep.subr.mxu0 %v804
    %954 = vmatpush1.msra.mxu0 %v803
    %955 = vmatprep.subr.mxu0 %v847
    %956 = vmatpush1.msra.mxu0 %v846
    %957 = vmatprep.subr.mxu0 %v890
    %958 = vmatpush1.msra.mxu0 %v889
    %959 = vmatprep.subr.mxu0 %v933
    %960 = vmatpush1.msra.mxu0 %v932
    %961 = vmatprep.subr.mxu0 0.0
    %962 = vmatpush1.msra.mxu0 0.0
    %963 = vmatprep.subr.mxu0 0.0
    %964 = vmatpush1.msra.mxu0 0.0
    %965 = vmatprep.subr.mxu0 0.0
    %966 = vmatpush1.msra.mxu0 0.0
    %967 = vmatprep.subr.mxu0 0.0
    %968 = vmatpush1.msra.mxu0 0.0
    %969 = vmatprep.subr.mxu0 0.0
    %970 = vmatpush1.msra.mxu0 0.0
    %971 = vmatprep.subr.mxu0 0.0
    %972 = vmatpush1.msra.mxu0 0.0
    %973 = vmatprep.subr.mxu0 0.0
    %974 = vmatpush1.msra.mxu0 0.0
    %975 = vmatprep.subr.mxu0 0.0
    %976 = vmatpush1.msra.mxu0 0.0
    %977 = vmatprep.subr.mxu0 0.0
    %978 = vmatpush1.msra.mxu0 0.0
    %979 = vmatprep.subr.mxu0 0.0
    %980 = vmatpush1.msra.mxu0 0.0
    %981 = vmatprep.subr.mxu0 0.0
    %982 = vmatpush1.msra.mxu0 0.0
    %983 = vmatprep.subr.mxu0 0.0
    %984 = vmatpush1.msra.mxu0 0.0
    %985 = vmatprep.subr.mxu0 0.0
    %986 = vmatpush1.msra.mxu0 0.0
    %987 = vmatprep.subr.mxu0 0.0
    %988 = vmatpush1.msra.mxu0 0.0
    %989 = vmatprep.subr.mxu0 0.0
    %990 = vmatpush1.msra.mxu0 0.0
    %991 = vmatprep.subr.mxu0 0.0
    %992 = vmatpush1.msra.mxu0 0.0
    %993 = vmatprep.subr.mxu0 0.0
    %994 = vmatpush1.msra.mxu0 0.0
    %995 = vmatprep.subr.mxu0 0.0
    %996 = vmatpush1.msra.mxu0 0.0
    %997 = vmatprep.subr.mxu0 0.0
    %998 = vmatpush1.msra.mxu0 0.0
    %999 = vmatprep.subr.mxu0 0.0
    %1000 = vmatpush1.msra.mxu0 0.0
    %1001 = vmatprep.subr.mxu0 0.0
    %1002 = vmatpush1.msra.mxu0 0.0
    %1003 = vmatprep.subr.mxu0 0.0
    %1004 = vmatpush1.msra.mxu0 0.0
    %1005 = vmatprep.subr.mxu0 0.0
    %1006 = vmatpush1.msra.mxu0 0.0
    %1007 = vmatprep.mubr.f32.mxu0 0.0
    %1008 = vmatmul.mubr.f32.gmra.mrb[0].mxu0 %v941
    %v1009 = vpop.f32.mrb[0].mxu0
    %v1010 = vadd.f32 %v938, %v1009
    %v1011 = vpop.f32.mrb[0].mxu0
    %v1012 = vadd.f32 %v938, %v1011
    %1013 = vdwg.mxu0
    %1014 = vmatprep.subr.mxu0 %v634
    %1015 = vmatpush1.msra.mxu0 %v633
    %1016 = vmatprep.subr.mxu0 %v677
    %1017 = vmatpush1.msra.mxu0 %v676
    %1018 = vmatprep.subr.mxu0 %v720
    %1019 = vmatpush1.msra.mxu0 %v719
    %1020 = vmatprep.subr.mxu0 %v763
    %1021 = vmatpush1.msra.mxu0 %v762
    %1022 = vmatprep.subr.mxu0 %v582
    %1023 = vmatpush1.msra.mxu0 %v581
    %1024 = vmatprep.subr.mxu0 %v806
    %1025 = vmatpush1.msra.mxu0 %v805
    %1026 = vmatprep.subr.mxu0 %v849
    %1027 = vmatpush1.msra.mxu0 %v848
    %1028 = vmatprep.subr.mxu0 %v892
    %1029 = vmatpush1.msra.mxu0 %v891
    %1030 = vmatprep.subr.mxu0 %v935
    %1031 = vmatpush1.msra.mxu0 %v934
    %1032 = vmatprep.subr.mxu0 0.0
    %1033 = vmatpush1.msra.mxu0 0.0
    %1034 = vmatprep.subr.mxu0 0.0
    %1035 = vmatpush1.msra.mxu0 0.0
    %1036 = vmatprep.subr.mxu0 0.0
    %1037 = vmatpush1.msra.mxu0 0.0
    %1038 = vmatprep.subr.mxu0 0.0
    %1039 = vmatpush1.msra.mxu0 0.0
    %1040 = vmatprep.subr.mxu0 0.0
    %1041 = vmatpush1.msra.mxu0 0.0
    %1042 = vmatprep.subr.mxu0 0.0
    %1043 = vmatpush1.msra.mxu0 0.0
    %1044 = vmatprep.subr.mxu0 0.0
    %1045 = vmatpush1.msra.mxu0 0.0
    %1046 = vmatprep.subr.mxu0 0.0
    %1047 = vmatpush1.msra.mxu0 0.0
    %1048 = vmatprep.subr.mxu0 0.0
    %1049 = vmatpush1.msra.mxu0 0.0
    %1050 = vmatprep.subr.mxu0 0.0
    %1051 = vmatpush1.msra.mxu0 0.0
    %1052 = vmatprep.subr.mxu0 0.0
    %1053 = vmatpush1.msra.mxu0 0.0
    %1054 = vmatprep.subr.mxu0 0.0
    %1055 = vmatpush1.msra.mxu0 0.0
    %1056 = vmatprep.subr.mxu0 0.0
    %1057 = vmatpush1.msra.mxu0 0.0
    %1058 = vmatprep.subr.mxu0 0.0
    %1059 = vmatpush1.msra.mxu0 0.0
    %1060 = vmatprep.subr.mxu0 0.0
    %1061 = vmatpush1.msra.mxu0 0.0
    %1062 = vmatprep.subr.mxu0 0.0
    %1063 = vmatpush1.msra.mxu0 0.0
    %1064 = vmatprep.subr.mxu0 0.0
    %1065 = vmatpush1.msra.mxu0 0.0
    %1066 = vmatprep.subr.mxu0 0.0
    %1067 = vmatpush1.msra.mxu0 0.0
    %1068 = vmatprep.subr.mxu0 0.0
    %1069 = vmatpush1.msra.mxu0 0.0
    %1070 = vmatprep.subr.mxu0 0.0
    %1071 = vmatpush1.msra.mxu0 0.0
    %1072 = vmatprep.subr.mxu0 0.0
    %1073 = vmatpush1.msra.mxu0 0.0
    %1074 = vmatprep.subr.mxu0 0.0
    %1075 = vmatpush1.msra.mxu0 0.0
    %1076 = vmatprep.subr.mxu0 0.0
    %1077 = vmatpush1.msra.mxu0 0.0
    %1078 = vmatprep.mubr.f32.mxu0 0.0
    %1079 = vmatmul.mubr.f32.gmra.mrb[0].mxu0 %v941
    %v1080 = vpop.f32.mrb[0].mxu0
    %v1081 = vadd.f32 %v938, %v1080
    %v1082 = vpop.f32.mrb[0].mxu0
    %v1083 = vadd.f32 %v938, %v1082
    %1084 = vdwg.mxu0
    %v1085 = vld [vmem:[#allocation2] sm:$0xff]
    %v1086 = vld [vmem:[#allocation2 + $0x8] sm:$0xff]
    %v1087 = vld [vmem:[#allocation2 + $0x10] sm:$0xff]
    %v1088 = vld [vmem:[#allocation2 + $0x18] sm:$0xff]
    %v1089 = vadd.f32 %v1085, %v1010
    %v1090 = vadd.f32 %v1086, %v1012
    %v1091 = vadd.f32 %v1087, %v1081
    %v1092 = vadd.f32 %v1088, %v1083
    %v1093 = vmax.f32 %v1089, 0.0
    %v1094 = vmax.f32 %v1090, 0.0
    %v1095 = vmax.f32 %v1091, 0.0
    %v1096 = vmax.f32 %v1092, 0.0
    %1097 = vst [vmem:[#allocation8] sm:$0xff] %v1093
    %1098 = vst [vmem:[#allocation8 + $0x8] sm:$0xff] %v1094
    %s1099 = scalar_lea.vmem [#allocation8], 16
    %1100 = vst [vmem:[%s1099] sm:$0xff] %v1095
    %1101 = vst [vmem:[%s1099 + $0x8] sm:$0xff] %v1096
    // Predicated region
    $region30: #{tpu_custom_call.1} parent=1 // pred_check
      _
    $region31: #{tpu_custom_call.1} parent=1 // pred_check_branch
      %1103 = sbr.rel (0) target = $region33
    $region32: #{tpu_custom_call.1} parent=1 // pred_region
      %s1105 = ssub.s32 512, 512
      %1106 = vsyncadd [#allocation5], %s1105
      %s1107 = sshll.u32 [#allocation8], 4
      %s1108 = int_to_ptr.vmem [resolvable:$true] %s1107
      %1113 = dma.vmem_to_hbm [thread:$0]  %s1108, 512, %s5, [#allocation5], 256, 256, 16
    $region33: #{tpu_custom_call.1} parent=1 // pred_fallthru
      _
    // Predicated region
    $region34: #{tpu_custom_call.1} parent=1 // pred_check
      _
    $region35: #{tpu_custom_call.1} parent=1 // pred_check_branch
      %1115 = sbr.rel (0) target = $region37
    $region36: #{tpu_custom_call.1} parent=1 // pred_region
      %1116 = dma.done [#allocation5], 512
    $region37: #{tpu_custom_call.1} parent=1 // pred_fallthru
      _
    %1117 = vsyncpa [#allocation4], 1
    %1118 = vsyncpa [#allocation7], 1
    %1119 = vsyncpa [#allocation5], 1

</llo_original>
